<compile_context>
chip_gen: v6e
topology: v6e:2x2x1
jax: 0.10.0
libtpu: 0.0.40
codegen_flags: <defaults>
</compile_context>

<pallas_src>
import jax
import jax.numpy as jnp
from jax.experimental import pallas as pl
from jax.experimental.pallas import tpu as pltpu

NHIDDEN = 32      # args.nhidden
BLOCK_B = 128     # batch tile on the lane axis


def odefunc_kernel(y_ref, w1_ref, b1_ref, w2_ref, b2_ref, o_ref):
    # y_ref : (2, TB)         transposed batch tile, batch on lanes
    # w1_ref: (nhidden, 2)    PyTorch-native (out, in)
    # b1_ref: (nhidden, 1)
    # w2_ref: (2, nhidden)    PyTorch-native (out, in)
    # b2_ref: (2, 1)
    # o_ref : (2, TB)         lane-dense output
    y = y_ref[...]                                   # (2, TB) float32
    w1 = w1_ref[...]                                 # (nhidden, 2)

    # Layer 1: K=2 contraction as two VPU broadcast-FMAs (MXU skipped on purpose).
    #   h[n, b] = W1[n, 0] * y[0, b] + W1[n, 1] * y[1, b] + b1[n]
    h = (w1[:, 0:1] * y[0:1, :]
         + w1[:, 1:2] * y[1:2, :]
         + b1_ref[...])                              # (nhidden, TB)
    h = jnp.maximum(h, 0.0)                          # ReLU (VPU)

    # Layer 2: (2, nhidden) @ (nhidden, TB) -> (2, TB); K=32, N=TB lanes (MXU).
    out = jnp.dot(w2_ref[...], h,
                  preferred_element_type=jnp.float32) + b2_ref[...]
    o_ref[...] = out.astype(o_ref.dtype)


def odefunc_forward(t, y, w1, b1, w2, b2, *, block_b=BLOCK_B):
    """Pallas equivalent of ODEFunc.forward(t, y). `t` is unused (as in PyTorch).

    y : (B, 2) float32
    w1: (nhidden, 2), b1: (nhidden,), w2: (2, nhidden), b2: (2,)   (PyTorch layout)
    returns (B, 2)
    """
    del t
    B, F = y.shape                       # F == 2
    nh = w1.shape[0]
    n_blocks = pl.cdiv(B, block_b)
    b_pad = n_blocks * block_b

    # Feature-major layout: batch onto lanes, zero-pad batch to the tile size.
    y_t = jnp.pad(y.T, ((0, 0), (0, b_pad - B)))     # (2, B_pad)
    b1_c = b1.reshape(nh, 1)
    b2_c = b2.reshape(F, 1)

    out_t = pl.pallas_call(
        odefunc_kernel,
        out_shape=jax.ShapeDtypeStruct((F, b_pad), y.dtype),
        grid_spec=pltpu.PrefetchScalarGridSpec(
            num_scalar_prefetch=0,
            grid=(n_blocks,),
            in_specs=[
                pl.BlockSpec((F, block_b), lambda i: (0, i)),   # y^T batch tile
                pl.BlockSpec((nh, F), lambda i: (0, 0)),        # W1 resident
                pl.BlockSpec((nh, 1), lambda i: (0, 0)),        # b1 resident
                pl.BlockSpec((F, nh), lambda i: (0, 0)),        # W2 resident
                pl.BlockSpec((F, 1), lambda i: (0, 0)),         # b2 resident
            ],
            out_specs=pl.BlockSpec((F, block_b), lambda i: (0, i)),
        ),
        compiler_params=pltpu.CompilerParams(
            dimension_semantics=("parallel",)),      # v7x: shard batch over 2 TCs
    )(y_t, w1, b1_c, w2, b2_c)

    return out_t[:, :B].T                            # back to (B, 2)


def init_params(key, nhidden=NHIDDEN, dtype=jnp.float32):
    """Deterministic init mirroring the PyTorch module:
       weights ~ Normal(0, 0.1), biases = 0.  Weights kept PyTorch-native (out, in)."""
    k1, k2 = jax.random.split(key)
    w1 = (0.1 * jax.random.normal(k1, (nhidden, 2))).astype(dtype)
    b1 = jnp.zeros((nhidden,), dtype)
    w2 = (0.1 * jax.random.normal(k2, (2, nhidden))).astype(dtype)
    b2 = jnp.zeros((2,), dtype)
    return w1, b1, w2, b2


if __name__ == "__main__":
    key = jax.random.PRNGKey(0)
    kp, ky = jax.random.split(key)

    batch = 8
    y = jax.random.normal(ky, (batch, 2), dtype=jnp.float32)
    t = jnp.zeros((), dtype=jnp.float32)             # ignored, as in PyTorch

    w1, b1, w2, b2 = init_params(kp)

    out = odefunc_forward(t, y, w1, b1, w2, b2)
    out = jax.block_until_ready(out)

    # Reference check in plain JAX (PyTorch semantics: y @ W.T + b)
    ref = jnp.maximum(y @ w1.T + b1[None, :], 0.0) @ w2.T + b2[None, :]
    assert out.shape == (batch, 2)
    assert jnp.allclose(out, ref, atol=1e-5, rtol=1e-5)

    print("KERNEL_OK")
</pallas_src>

<mosaic_0001>
module attributes {stable_mosaic.version = 11 : i64} {
  func.func @odefunc_kernel(%arg0: i32, %arg1: memref<2x128xf32, #tpu.memory_space<vmem>>, %arg2: memref<32x2xf32, #tpu.memory_space<vmem>>, %arg3: memref<32x1xf32, #tpu.memory_space<vmem>>, %arg4: memref<2x32xf32, #tpu.memory_space<vmem>>, %arg5: memref<2x1xf32, #tpu.memory_space<vmem>>, %arg6: memref<2x128xf32, #tpu.memory_space<vmem>>) attributes {dimension_semantics = [#tpu.dimension_semantics<parallel>], iteration_bounds = array<i64: 1>, scalar_prefetch = 0 : i64, scratch_operands = 0 : i64, tpu.core_type = #tpu.core_type<tc>, window_params = [{transform_indices = @transform_0, window_bounds = array<i64: 2, 128>}, {pipeline_mode = #tpu.pipeline_mode<synchronous>, transform_indices = @transform_1, window_bounds = array<i64: 32, 2>}, {pipeline_mode = #tpu.pipeline_mode<synchronous>, transform_indices = @transform_2, window_bounds = array<i64: 32, 1>}, {pipeline_mode = #tpu.pipeline_mode<synchronous>, transform_indices = @transform_3, window_bounds = array<i64: 2, 32>}, {pipeline_mode = #tpu.pipeline_mode<synchronous>, transform_indices = @transform_4, window_bounds = array<i64: 2, 1>}, {transform_indices = @transform_5, window_bounds = array<i64: 2, 128>}]} {
    %c0 = arith.constant 0 : index
    %c0_0 = arith.constant 0 : index
    %0 = vector.load %arg1[%c0, %c0_0] : memref<2x128xf32, #tpu.memory_space<vmem>>, vector<2x128xf32>
    %c0_1 = arith.constant 0 : index
    %c0_2 = arith.constant 0 : index
    %1 = vector.load %arg2[%c0_1, %c0_2] : memref<32x2xf32, #tpu.memory_space<vmem>>, vector<32x2xf32>
    %2 = vector.extract_strided_slice %1 {offsets = [0, 0], sizes = [32, 1], strides = [1, 1]} : vector<32x2xf32> to vector<32x1xf32>
    %3 = vector.extract_strided_slice %0 {offsets = [0, 0], sizes = [1, 128], strides = [1, 1]} : vector<2x128xf32> to vector<1x128xf32>
    %4 = vector.broadcast %2 : vector<32x1xf32> to vector<32x128xf32>
    %5 = vector.broadcast %3 : vector<1x128xf32> to vector<32x128xf32>
    %6 = arith.mulf %4, %5 : vector<32x128xf32>
    %7 = vector.extract_strided_slice %1 {offsets = [0, 1], sizes = [32, 1], strides = [1, 1]} : vector<32x2xf32> to vector<32x1xf32>
    %8 = vector.extract_strided_slice %0 {offsets = [1, 0], sizes = [1, 128], strides = [1, 1]} : vector<2x128xf32> to vector<1x128xf32>
    %9 = vector.broadcast %7 : vector<32x1xf32> to vector<32x128xf32>
    %10 = vector.broadcast %8 : vector<1x128xf32> to vector<32x128xf32>
    %11 = arith.mulf %9, %10 : vector<32x128xf32>
    %12 = arith.addf %6, %11 : vector<32x128xf32>
    %c0_3 = arith.constant 0 : index
    %c0_4 = arith.constant 0 : index
    %13 = vector.load %arg3[%c0_3, %c0_4] : memref<32x1xf32, #tpu.memory_space<vmem>>, vector<32x1xf32>
    %14 = vector.broadcast %13 : vector<32x1xf32> to vector<32x128xf32>
    %15 = arith.addf %12, %14 : vector<32x128xf32>
    %cst = arith.constant 0.000000e+00 : f32
    %16 = vector.broadcast %cst : f32 to vector<32x128xf32>
    %17 = arith.maximumf %15, %16 : vector<32x128xf32>
    %c0_5 = arith.constant 0 : index
    %c0_6 = arith.constant 0 : index
    %18 = vector.load %arg4[%c0_5, %c0_6] : memref<2x32xf32, #tpu.memory_space<vmem>>, vector<2x32xf32>
    %cst_7 = arith.constant dense<0.000000e+00> : vector<2x128xf32>
    %19 = tpu.matmul %18, %17, %cst_7 {dimension_numbers = #tpu.dot_dimension_numbers<[1], [0], [0], [1], [0, 0, 1, 1], [], []>} : vector<2x32xf32>, vector<32x128xf32>, vector<2x128xf32> -> vector<2x128xf32>
    %c0_8 = arith.constant 0 : index
    %c0_9 = arith.constant 0 : index
    %20 = vector.load %arg5[%c0_8, %c0_9] : memref<2x1xf32, #tpu.memory_space<vmem>>, vector<2x1xf32>
    %21 = vector.broadcast %20 : vector<2x1xf32> to vector<2x128xf32>
    %22 = arith.addf %19, %21 : vector<2x128xf32>
    %c0_10 = arith.constant 0 : index
    %c0_11 = arith.constant 0 : index
    %23 = vector.load %arg6[%c0_10, %c0_11] : memref<2x128xf32, #tpu.memory_space<vmem>>, vector<2x128xf32>
    tpu.vector_store %arg6[%c0_10, %c0_11], %22 {strides = array<i32>} : memref<2x128xf32, #tpu.memory_space<vmem>>, vector<2x128xf32>,
    return
  }
  func.func @transform_0(%arg0: i32) -> (i32, i32) {
    %c0_i32 = arith.constant 0 : i32
    %c0_i32_0 = arith.constant 0 : i32
    return %c0_i32, %arg0 : i32, i32
  }
  func.func @transform_1(%arg0: i32) -> (i32, i32) {
    %c0_i32 = arith.constant 0 : i32
    %c0_i32_0 = arith.constant 0 : i32
    %c0_i32_1 = arith.constant 0 : i32
    return %c0_i32, %c0_i32_0 : i32, i32
  }
  func.func @transform_2(%arg0: i32) -> (i32, i32) {
    %c0_i32 = arith.constant 0 : i32
    %c0_i32_0 = arith.constant 0 : i32
    %c0_i32_1 = arith.constant 0 : i32
    return %c0_i32, %c0_i32_0 : i32, i32
  }
  func.func @transform_3(%arg0: i32) -> (i32, i32) {
    %c0_i32 = arith.constant 0 : i32
    %c0_i32_0 = arith.constant 0 : i32
    %c0_i32_1 = arith.constant 0 : i32
    return %c0_i32, %c0_i32_0 : i32, i32
  }
  func.func @transform_4(%arg0: i32) -> (i32, i32) {
    %c0_i32 = arith.constant 0 : i32
    %c0_i32_0 = arith.constant 0 : i32
    %c0_i32_1 = arith.constant 0 : i32
    return %c0_i32, %c0_i32_0 : i32, i32
  }
  func.func @transform_5(%arg0: i32) -> (i32, i32) {
    %c0_i32 = arith.constant 0 : i32
    %c0_i32_0 = arith.constant 0 : i32
    return %c0_i32, %arg0 : i32, i32
  }
}

</mosaic_0001>

<llo_original>
// kernel: tpu_custom_call.1
$region0: #{tpu_custom_call.1}
  #allocation0 [shape = 'u32[]', space=smem, size = 0x4, offset = 0x4, fixed_abs, tag = 'smem constant byte address 0x4 - core index']
  #allocation1 [shape = 'u32[144,128]{1,0:T(1,128)}', space=vmem, size = 0x12000, scoped, tag = 'internal scratch']
  %s0 = inlined_call_operand.vmem [shape: f32[2,128], index: 0, kind: input, shape index: {}]
  %s1 = inlined_call_operand.vmem [shape: f32[32,2], index: 1, kind: input, shape index: {}]
  %s2 = inlined_call_operand.vmem [shape: f32[32,1], index: 2, kind: input, shape index: {}]
  %s3 = inlined_call_operand.vmem [shape: f32[2,32], index: 3, kind: input, shape index: {}]
  %s4 = inlined_call_operand.vmem [shape: f32[2,1], index: 4, kind: input, shape index: {}]
  %s5 = inlined_call_operand.hbm [shape: f32[2,128], index: 5, kind: output, shape index: {}]
  %s6 = sld [smem:[#allocation0]]
  $region30: #{tpu_custom_call.1} parent=0
    _
  %s8 = ssub.s32 1, %s6
  %s9 = scalar_select 0, %s8, %s6
  $region1: #{tpu_custom_call.1} parent=0
    #allocation2 [shape = 'u8[1024]{0}', space=vmem, size = 0x400, scoped, tag = 'output window, operand 0, single buffered']
    #allocation3 [shape = 's32[1]{0}', space=sflag, size = 0x4, scoped, tag = 'scoped memory for tpu_custom_call.1']
    %10 = vsyncpa [#allocation3], 0
    // Predicated region
    $region2: #{tpu_custom_call.1} parent=1 // pred_check
      _
    $region3: #{tpu_custom_call.1} parent=1 // pred_check_branch
      %12 = sbr.rel (0) target = $region5
    $region4: #{tpu_custom_call.1} parent=1 // pred_region
      _
    $region5: #{tpu_custom_call.1} parent=1 // pred_fallthru
      _
    // Predicated region
    $region6: #{tpu_custom_call.1} parent=1 // pred_check
      _
    $region7: #{tpu_custom_call.1} parent=1 // pred_check_branch
      %14 = sbr.rel (0) target = $region9
    $region8: #{tpu_custom_call.1} parent=1 // pred_region
      _
    $region9: #{tpu_custom_call.1} parent=1 // pred_fallthru
      _
    // Predicated region
    $region10: #{tpu_custom_call.1} parent=1 // pred_check
      _
    $region11: #{tpu_custom_call.1} parent=1 // pred_check_branch
      %16 = sbr.rel (0) target = $region13
    $region12: #{tpu_custom_call.1} parent=1 // pred_region
      _
    $region13: #{tpu_custom_call.1} parent=1 // pred_fallthru
      _
    // Predicated region
    $region14: #{tpu_custom_call.1} parent=1 // pred_check
      _
    $region15: #{tpu_custom_call.1} parent=1 // pred_check_branch
      %18 = sbr.rel (0) target = $region17
    $region16: #{tpu_custom_call.1} parent=1 // pred_region
      _
    $region17: #{tpu_custom_call.1} parent=1 // pred_fallthru
      _
    // Predicated region
    $region18: #{tpu_custom_call.1} parent=1 // pred_check
      _
    $region19: #{tpu_custom_call.1} parent=1 // pred_check_branch
      %20 = sbr.rel (0) target = $region21
    $region20: #{tpu_custom_call.1} parent=1 // pred_region
      _
    $region21: #{tpu_custom_call.1} parent=1 // pred_fallthru
      _
    %v21 = vld [vmem:[%s0] sm:$0x3]
    %v22 = vld [vmem:[%s1] sm:$0xff]
    %v23 = vld [vmem:[%s1 + $0x8] sm:$0xff]
    %v24 = vld [vmem:[%s1 + $0x10] sm:$0xff]
    %v25 = vld [vmem:[%s1 + $0x18] sm:$0xff]
    %27 = vset.pattern.permute.xlu0 0
    %28 = vperm.xlu0 %27, %v22
    %v29 = vpop.permute.xlu0 %28
    %32 = vset.pattern.permute.xlu0 0
    %33 = vperm.xlu0 %32, %v23
    %v34 = vpop.permute.xlu0 %33
    %37 = vset.pattern.permute.xlu0 0
    %38 = vperm.xlu0 %37, %v24
    %v39 = vpop.permute.xlu0 %38
    %42 = vset.pattern.permute.xlu0 0
    %43 = vperm.xlu0 %42, %v25
    %v44 = vpop.permute.xlu0 %43
    %v46 = vlaneseq
    %v47 = vshrl.u32 %v46, 7
    %v48 = vsub.s32 0, %v47
    %v49 = vrot.slane %v21, %v48
    %v50 = vmul.f32 %v29, %v49
    %v51 = vmul.f32 %v34, %v49
    %v52 = vmul.f32 %v39, %v49
    %v53 = vmul.f32 %v44, %v49
    %54 = vset.pattern.permute.xlu0 1
    %55 = vperm.xlu0 %54, %v22
    %v56 = vpop.permute.xlu0 %55
    %58 = vset.pattern.permute.xlu0 1
    %59 = vperm.xlu0 %58, %v23
    %v60 = vpop.permute.xlu0 %59
    %62 = vset.pattern.permute.xlu0 1
    %63 = vperm.xlu0 %62, %v24
    %v64 = vpop.permute.xlu0 %63
    %66 = vset.pattern.permute.xlu0 1
    %67 = vperm.xlu0 %66, %v25
    %v68 = vpop.permute.xlu0 %67
    %v70 = vlaneseq
    %v71 = vshrl.u32 %v70, 7
    %v72 = vsub.s32 1, %v71
    %v73 = vrot.slane %v21, %v72
    %v74 = vmul.f32 %v56, %v73
    %v75 = vmul.f32 %v60, %v73
    %v76 = vmul.f32 %v64, %v73
    %v77 = vmul.f32 %v68, %v73
    %v78 = vadd.f32 %v50, %v74
    %v79 = vadd.f32 %v51, %v75
    %v80 = vadd.f32 %v52, %v76
    %v81 = vadd.f32 %v53, %v77
    %v82 = vld [vmem:[%s2] sm:$0xff]
    %v83 = vld [vmem:[%s2 + $0x8] sm:$0xff]
    %v84 = vld [vmem:[%s2 + $0x10] sm:$0xff]
    %v85 = vld [vmem:[%s2 + $0x18] sm:$0xff]
    %87 = vset.pattern.permute.xlu0 0
    %88 = vperm.xlu0 %87, %v82
    %v89 = vpop.permute.xlu0 %88
    %92 = vset.pattern.permute.xlu0 0
    %93 = vperm.xlu0 %92, %v83
    %v94 = vpop.permute.xlu0 %93
    %97 = vset.pattern.permute.xlu0 0
    %98 = vperm.xlu0 %97, %v84
    %v99 = vpop.permute.xlu0 %98
    %102 = vset.pattern.permute.xlu0 0
    %103 = vperm.xlu0 %102, %v85
    %v104 = vpop.permute.xlu0 %103
    %v106 = vadd.f32 %v78, %v89
    %v107 = vadd.f32 %v79, %v94
    %v108 = vadd.f32 %v80, %v99
    %v109 = vadd.f32 %v81, %v104
    %v110 = vmax.f32 %v106, 0.0
    %v111 = vmax.f32 %v107, 0.0
    %v112 = vmax.f32 %v108, 0.0
    %v113 = vmax.f32 %v109, 0.0
    %v114 = vld [vmem:[%s3] sm:$0x3]
    %v115 = vld [vmem:[%s4] sm:$0x3]
    %117 = vset.pattern.permute.xlu0 0
    %118 = vperm.xlu0 %117, %v115
    %v119 = vpop.permute.xlu0 %118
    %vm121 = vcmask 261120
    %v123 = vsel %vm121, %v114, 0
    %125 = vmatprep.subr.mxu0 0.0
    %126 = vmatpush1.msra.mxu0 0.0
    %127 = vmatprep.subr.mxu0 0.0
    %128 = vmatpush1.msra.mxu0 0.0
    %129 = vmatprep.subr.mxu0 0.0
    %130 = vmatpush1.msra.mxu0 0.0
    %131 = vmatprep.subr.mxu0 0.0
    %132 = vmatpush1.msra.mxu0 0.0
    %133 = vmatprep.subr.mxu0 0.0
    %134 = vmatpush1.msra.mxu0 0.0
    %135 = vmatprep.subr.mxu0 0.0
    %136 = vmatpush1.msra.mxu0 0.0
    %137 = vmatprep.subr.mxu0 0.0
    %138 = vmatpush1.msra.mxu0 0.0
    %139 = vmatprep.subr.mxu0 0.0
    %140 = vmatpush1.msra.mxu0 0.0
    %141 = vmatprep.subr.mxu0 0.0
    %142 = vmatpush1.msra.mxu0 0.0
    %143 = vmatprep.subr.mxu0 0.0
    %144 = vmatpush1.msra.mxu0 0.0
    %145 = vmatprep.subr.mxu0 0.0
    %146 = vmatpush1.msra.mxu0 0.0
    %147 = vmatprep.subr.mxu0 0.0
    %148 = vmatpush1.msra.mxu0 0.0
    %149 = vmatprep.subr.mxu0 0.0
    %150 = vmatpush1.msra.mxu0 %v113
    %151 = vmatprep.subr.mxu0 0.0
    %152 = vmatpush1.msra.mxu0 %v112
    %153 = vmatprep.subr.mxu0 0.0
    %154 = vmatpush1.msra.mxu0 %v111
    %155 = vmatprep.subr.mxu0 0.0
    %156 = vmatpush1.msra.mxu0 %v110
    %157 = vmatprep.subr.mxu0 0.0
    %158 = vmatpush2.msra.mxu0 0.0
    %159 = vmatprep.subr.mxu0 0.0
    %160 = vmatpush2.msra.mxu0 0.0
    %161 = vmatprep.subr.mxu0 0.0
    %162 = vmatpush2.msra.mxu0 0.0
    %163 = vmatprep.subr.mxu0 0.0
    %164 = vmatpush2.msra.mxu0 0.0
    %165 = vmatprep.subr.mxu0 0.0
    %166 = vmatpush2.msra.mxu0 0.0
    %167 = vmatprep.subr.mxu0 0.0
    %168 = vmatpush2.msra.mxu0 0.0
    %169 = vmatprep.subr.mxu0 0.0
    %170 = vmatpush2.msra.mxu0 0.0
    %171 = vmatprep.subr.mxu0 0.0
    %172 = vmatpush2.msra.mxu0 0.0
    %173 = vmatprep.subr.mxu0 0.0
    %174 = vmatpush2.msra.mxu0 0.0
    %175 = vmatprep.subr.mxu0 0.0
    %176 = vmatpush2.msra.mxu0 0.0
    %177 = vmatprep.subr.mxu0 0.0
    %178 = vmatpush2.msra.mxu0 0.0
    %179 = vmatprep.subr.mxu0 0.0
    %180 = vmatpush2.msra.mxu0 0.0
    %181 = vmatprep.subr.mxu0 0.0
    %182 = vmatpush2.msra.mxu0 0.0
    %183 = vmatprep.subr.mxu0 0.0
    %184 = vmatpush2.msra.mxu0 0.0
    %185 = vmatprep.subr.mxu0 0.0
    %186 = vmatpush2.msra.mxu0 0.0
    %187 = vmatprep.subr.mxu0 0.0
    %188 = vmatpush2.msra.mxu0 0.0
    %189 = vmatprep.mubr.f32.mxu0 0.0
    %190 = vmatmul.mubr.f32.gmra.mxu0 %v123
    %v191 = vpop.f32.mrf.mxu0
    %v192 = vadd.f32 %v119, %v191
    %v193 = vpop.f32.mrf.mxu0
    %194 = vdwg.mxu0
    %195 = vst [vmem:[#allocation2] sm:$0x3] %v192
    // Predicated region
    $region22: #{tpu_custom_call.1} parent=1 // pred_check
      _
    $region23: #{tpu_custom_call.1} parent=1 // pred_check_branch
      %197 = sbr.rel (0) target = $region25
    $region24: #{tpu_custom_call.1} parent=1 // pred_region
      %s199 = ssub.s32 32, 32
      %200 = vsyncadd [#allocation3], %s199
      %s202 = sshll.u32 [#allocation2], 4
      %s203 = int_to_ptr.vmem [resolvable:$true] %s202
      %205 = dma.vmem_to_hbm [thread:$0]  %s203, 32, %s5, [#allocation3]
    $region25: #{tpu_custom_call.1} parent=1 // pred_fallthru
      _
    // Predicated region
    $region26: #{tpu_custom_call.1} parent=1 // pred_check
      _
    $region27: #{tpu_custom_call.1} parent=1 // pred_check_branch
      %207 = sbr.rel (0) target = $region29
    $region28: #{tpu_custom_call.1} parent=1 // pred_region
      %208 = dma.done [#allocation3], 32
    $region29: #{tpu_custom_call.1} parent=1 // pred_fallthru
      _
    %209 = vsyncpa [#allocation3], 1

</llo_original>
